<compile_context>
chip_gen: v6e
topology: v6e:2x2x1
jax: 0.10.0
libtpu: 0.0.40
codegen_flags: <defaults>
</compile_context>

<pallas_src>
import functools

import jax
import jax.numpy as jnp
import numpy as np
from jax import lax
from jax.experimental import pallas as pl
from jax.experimental.pallas import tpu as pltpu


def _gridding_reverse_kernel(*refs, scale, tz, has_halo):
    S, TZ = scale, tz
    L = S * S
    if has_halo:
        cur_ref, prev_ref, px_ref, py_ref, pz_ref = refs
    else:
        cur_ref, px_ref, py_ref, pz_ref = refs
        prev_ref = None

    g = cur_ref[0]                                   # (TZ, L), lane index = y*S + x

    # dz == 0 corners via lane rolls.  Wrapped lanes only land in x == 0 or
    # y == 0 cells, which are masked out below.
    gx = pltpu.roll(g, 1, axis=1)                    # grid[z, y,   x-1]
    gy = pltpu.roll(g, S, axis=1)                    # grid[z, y-1, x  ]
    gxy = pltpu.roll(g, S + 1, axis=1)               # grid[z, y-1, x-1]

    # dz == 1 slab: sublane roll by one z-row; fix row 0 from the halo block.
    gz = pltpu.roll(g, 1, axis=0)
    if has_halo:
        halo = prev_ref[0, pl.ds(TZ - 1, 1), :]      # slab zb*TZ - 1, shape (1, L)
        row0 = lax.broadcasted_iota(jnp.int32, (TZ, L), 0) == 0
        gz = jnp.where(row0, halo, gz)
    # Without a halo, row 0 corresponds to z == 0 and is masked below.
    gzx = pltpu.roll(gz, 1, axis=1)
    gzy = pltpu.roll(gz, S, axis=1)
    gzxy = pltpu.roll(gz, S + 1, axis=1)

    w_z1 = (gz + gzx) + (gzy + gzxy)                 # corners with dz == 1
    w_all = ((g + gx) + (gy + gxy)) + w_z1           # all 8 corner weights
    w_x1 = (gx + gxy) + (gzx + gzxy)                 # corners with dx == 1
    w_y1 = (gy + gxy) + (gzy + gzxy)                 # corners with dy == 1

    lane = lax.broadcasted_iota(jnp.int32, (TZ, L), 1)
    if S & (S - 1) == 0:                             # power-of-two scale: bit ops
        y_i = lane >> (S.bit_length() - 1)
        x_i = lane & (S - 1)
    else:
        y_i = lane // S
        x_i = lane - y_i * S
    z_i = pl.program_id(1) * TZ + lax.broadcasted_iota(jnp.int32, (TZ, L), 0)

    valid = (x_i >= 1) & (y_i >= 1) & (z_i >= 1) & (w_all != 0.0)
    inv_w = 1.0 / jnp.where(w_all != 0.0, w_all, 1.0)

    # Weighted-centroid identity + folded affine tail:
    #   ((c - Wd1/W) - S//2) / S * 2  ==  c*s - off - Wd1 * (inv_w * s)
    s = 2.0 / float(S)
    off = float(S // 2) * s
    inv_ws = inv_w * s
    px = x_i.astype(jnp.float32) * s - off - w_x1 * inv_ws
    py = y_i.astype(jnp.float32) * s - off - w_y1 * inv_ws
    pz = z_i.astype(jnp.float32) * s - off - w_z1 * inv_ws

    px_ref[0] = jnp.where(valid, px, 0.0)
    py_ref[0] = jnp.where(valid, py, 0.0)
    pz_ref[0] = jnp.where(valid, pz, 0.0)


def _pick_block_z(scale):
    """Largest z-block (divisor of scale) whose VMEM working set fits the budget.

    Peak VMEM ~ (double-buffered I/O + ~14 live block-sized temporaries)
              ~ 96 * TZ * S^2 bytes.  Budget kept well under v7x's 64 MiB.
    """
    budget = 30 * 1024 * 1024
    cap = max(1, budget // (96 * scale * scale))
    if scale <= cap:
        return scale
    divs = [d for d in range(1, scale) if scale % d == 0 and d <= cap]
    aligned = [d for d in divs if d % 8 == 0]
    if aligned:
        return max(aligned)
    return max(divs) if divs else 1


@functools.partial(jax.jit, static_argnames=("scale", "block_z"))
def gridding_reverse(grid, scale, block_z=None):
    B = grid.shape[0]
    S = int(scale)
    assert grid.shape[1:] == (S, S, S), "grid must be (B, scale, scale, scale)"
    grid = grid.astype(jnp.float32)
    if S == 1:
        return jnp.zeros((B, 1, 3), jnp.float32)

    L = S * S
    TZ = _pick_block_z(S) if block_z is None else int(block_z)
    assert S % TZ == 0, "block_z must divide scale"
    has_halo = TZ < S
    nz = S // TZ

    g2 = grid.reshape(B, S, L)  # free view: folds (Y, X) into the lane dimension

    kernel = functools.partial(
        _gridding_reverse_kernel, scale=S, tz=TZ, has_halo=has_halo
    )

    io_spec = pl.BlockSpec((1, TZ, L), lambda b, zb: (b, zb, 0))
    in_specs = [io_spec]
    args = (g2,)
    if has_halo:
        # Previous z-block (clamped at 0); only its last slab is used.
        in_specs.append(
            pl.BlockSpec((1, TZ, L), lambda b, zb: (b, jnp.maximum(zb - 1, 0), 0))
        )
        args = (g2, g2)

    est_vmem = int(96 * TZ * L * 1.25)
    vmem_limit = int(min(40 * 1024 * 1024, max(16 * 1024 * 1024, est_vmem)))

    px, py, pz = pl.pallas_call(
        kernel,
        out_shape=tuple(
            jax.ShapeDtypeStruct((B, S, L), jnp.float32) for _ in range(3)
        ),
        grid_spec=pltpu.PrefetchScalarGridSpec(
            num_scalar_prefetch=0,
            grid=(B, nz),
            in_specs=in_specs,
            out_specs=(io_spec, io_spec, io_spec),
        ),
        compiler_params=pltpu.CompilerParams(
            dimension_semantics=("parallel", "parallel"),
            vmem_limit_bytes=vmem_limit,
        ),
    )(*args)

    # TODO(synk): this channel-last interleave is one extra memory-bound XLA pass;
    # an in-kernel 3-way lane interleave does not lower reliably, so it stays here.
    return jnp.stack([px, py, pz], axis=-1).reshape(B, S * S * S, 3)


class GriddingReverse:
    """JAX/Pallas equivalent of the PyTorch GriddingReverse module (forward only)."""

    def __init__(self, scale=1):
        self.scale = scale

    def __call__(self, grid):
        return gridding_reverse(grid, self.scale)


def gridding_reverse_ref(grid, scale):
    """Pure-JAX reference with identical semantics (for validation)."""
    S = scale
    B = grid.shape[0]
    g = grid.astype(jnp.float32)

    def sh(a, axis):
        pad = [(0, 0)] * a.ndim
        pad[axis] = (1, 0)
        return lax.slice_in_dim(jnp.pad(a, pad), 0, S, axis=axis)

    W = jnp.zeros_like(g)
    Wx = jnp.zeros_like(g)
    Wy = jnp.zeros_like(g)
    Wz = jnp.zeros_like(g)
    for dz in (0, 1):
        for dy in (0, 1):
            for dx in (0, 1):
                w = g
                if dz:
                    w = sh(w, 1)
                if dy:
                    w = sh(w, 2)
                if dx:
                    w = sh(w, 3)
                W = W + w
                Wx = Wx + dx * w
                Wy = Wy + dy * w
                Wz = Wz + dz * w

    zi = jnp.arange(S, dtype=jnp.float32).reshape(1, S, 1, 1)
    yi = jnp.arange(S, dtype=jnp.float32).reshape(1, 1, S, 1)
    xi = jnp.arange(S, dtype=jnp.float32).reshape(1, 1, 1, S)
    valid = (xi >= 1) & (yi >= 1) & (zi >= 1) & (W != 0)
    inv = 1.0 / jnp.where(W != 0, W, 1.0)
    half = float(scale // 2)
    px = jnp.where(valid, xi - Wx * inv - half, 0.0)
    py = jnp.where(valid, yi - Wy * inv - half, 0.0)
    pz = jnp.where(valid, zi - Wz * inv - half, 0.0)
    pt = jnp.stack([px, py, pz], axis=-1).reshape(B, S ** 3, 3)
    return pt / scale * 2


if __name__ == "__main__":
    B, S = 2, 16
    key = jax.random.PRNGKey(0)
    grid = jax.random.uniform(key, (B, S, S, S), dtype=jnp.float32)
    # Zero out some cells to exercise the empty-neighborhood (W == 0) path.
    grid = grid * (grid > 0.3).astype(jnp.float32)

    model = GriddingReverse(scale=S)
    ptcloud = jax.block_until_ready(model(grid))
    assert ptcloud.shape == (B, S ** 3, 3) and ptcloud.dtype == jnp.float32

    ref = gridding_reverse_ref(grid, S)
    np.testing.assert_allclose(
        np.asarray(ptcloud), np.asarray(ref), rtol=1e-5, atol=1e-5
    )

    # Also exercise the z-blocked (halo) path used for very large scales.
    pt_blocked = jax.block_until_ready(gridding_reverse(grid, S, block_z=8))
    np.testing.assert_allclose(
        np.asarray(pt_blocked), np.asarray(ref), rtol=1e-5, atol=1e-5
    )

    print("KERNEL_OK")
</pallas_src>

<mosaic_0001>
module attributes {stable_mosaic.version = 11 : i64} {
  func.func @_gridding_reverse_kernel(%arg0: i32, %arg1: i32, %arg2: memref<1x16x256xf32, #tpu.memory_space<vmem>>, %arg3: memref<1x16x256xf32, #tpu.memory_space<vmem>>, %arg4: memref<1x16x256xf32, #tpu.memory_space<vmem>>, %arg5: memref<1x16x256xf32, #tpu.memory_space<vmem>>) attributes {dimension_semantics = [#tpu.dimension_semantics<parallel>, #tpu.dimension_semantics<parallel>], iteration_bounds = array<i64: 2, 1>, scalar_prefetch = 0 : i64, scratch_operands = 0 : i64, tpu.core_type = #tpu.core_type<tc>, window_params = [{transform_indices = @transform_0, window_bounds = array<i64: 1, 16, 256>}, {transform_indices = @transform_1, window_bounds = array<i64: 1, 16, 256>}, {transform_indices = @transform_2, window_bounds = array<i64: 1, 16, 256>}, {transform_indices = @transform_3, window_bounds = array<i64: 1, 16, 256>}]} {
    %c0 = arith.constant 0 : index
    %c0_0 = arith.constant 0 : index
    %c0_1 = arith.constant 0 : index
    %0 = vector.load %arg2[%c0, %c0_0, %c0_1] : memref<1x16x256xf32, #tpu.memory_space<vmem>>, vector<1x16x256xf32>
    %1 = vector.shape_cast %0 : vector<1x16x256xf32> to vector<16x256xf32>
    %c1_i32 = arith.constant 1 : i32
    %2 = tpu.dynamic_rotate %1 by %c1_i32 dim 1 : vector<16x256xf32>, i32 -> vector<16x256xf32>
    %c16_i32 = arith.constant 16 : i32
    %3 = tpu.dynamic_rotate %1 by %c16_i32 dim 1 : vector<16x256xf32>, i32 -> vector<16x256xf32>
    %c17_i32 = arith.constant 17 : i32
    %4 = tpu.dynamic_rotate %1 by %c17_i32 dim 1 : vector<16x256xf32>, i32 -> vector<16x256xf32>
    %c1_i32_2 = arith.constant 1 : i32
    %5 = tpu.dynamic_rotate %1 by %c1_i32_2 dim 0 : vector<16x256xf32>, i32 -> vector<16x256xf32>
    %c1_i32_3 = arith.constant 1 : i32
    %6 = tpu.dynamic_rotate %5 by %c1_i32_3 dim 1 : vector<16x256xf32>, i32 -> vector<16x256xf32>
    %c16_i32_4 = arith.constant 16 : i32
    %7 = tpu.dynamic_rotate %5 by %c16_i32_4 dim 1 : vector<16x256xf32>, i32 -> vector<16x256xf32>
    %c17_i32_5 = arith.constant 17 : i32
    %8 = tpu.dynamic_rotate %5 by %c17_i32_5 dim 1 : vector<16x256xf32>, i32 -> vector<16x256xf32>
    %9 = arith.addf %5, %6 : vector<16x256xf32>
    %10 = arith.addf %7, %8 : vector<16x256xf32>
    %11 = arith.addf %9, %10 : vector<16x256xf32>
    %12 = arith.addf %1, %2 : vector<16x256xf32>
    %13 = arith.addf %3, %4 : vector<16x256xf32>
    %14 = arith.addf %12, %13 : vector<16x256xf32>
    %15 = arith.addf %14, %11 : vector<16x256xf32>
    %16 = arith.addf %2, %4 : vector<16x256xf32>
    %17 = arith.addf %6, %8 : vector<16x256xf32>
    %18 = arith.addf %16, %17 : vector<16x256xf32>
    %19 = arith.addf %3, %4 : vector<16x256xf32>
    %20 = arith.addf %7, %8 : vector<16x256xf32>
    %21 = arith.addf %19, %20 : vector<16x256xf32>
    %22 = tpu.iota {dimensions = array<i32: 1>} : vector<16x256xi32>
    %c4_i32 = arith.constant 4 : i32
    %23 = vector.broadcast %c4_i32 : i32 to vector<16x256xi32>
    %24 = arith.shrsi %22, %23 : vector<16x256xi32>
    %c15_i32 = arith.constant 15 : i32
    %25 = vector.broadcast %c15_i32 : i32 to vector<16x256xi32>
    %26 = arith.andi %22, %25 : vector<16x256xi32>
    %c16_i32_6 = arith.constant 16 : i32
    %27 = arith.muli %arg1, %c16_i32_6 : i32
    %28 = tpu.iota {dimensions = array<i32: 0>} : vector<16x256xi32>
    %29 = vector.broadcast %27 : i32 to vector<16x256xi32>
    %30 = arith.addi %29, %28 : vector<16x256xi32>
    %c1_i32_7 = arith.constant 1 : i32
    %31 = vector.broadcast %c1_i32_7 : i32 to vector<16x256xi32>
    %32 = arith.cmpi sge, %26, %31 : vector<16x256xi32>
    %c1_i32_8 = arith.constant 1 : i32
    %33 = vector.broadcast %c1_i32_8 : i32 to vector<16x256xi32>
    %34 = arith.cmpi sge, %24, %33 : vector<16x256xi32>
    %35 = arith.andi %32, %34 : vector<16x256xi1>
    %c1_i32_9 = arith.constant 1 : i32
    %36 = vector.broadcast %c1_i32_9 : i32 to vector<16x256xi32>
    %37 = arith.cmpi sge, %30, %36 : vector<16x256xi32>
    %38 = arith.andi %35, %37 : vector<16x256xi1>
    %cst = arith.constant 0.000000e+00 : f32
    %39 = vector.broadcast %cst : f32 to vector<16x256xf32>
    %40 = arith.cmpf one, %15, %39 : vector<16x256xf32>
    %41 = arith.andi %38, %40 : vector<16x256xi1>
    %cst_10 = arith.constant 0.000000e+00 : f32
    %42 = vector.broadcast %cst_10 : f32 to vector<16x256xf32>
    %43 = arith.cmpf one, %15, %42 : vector<16x256xf32>
    %cst_11 = arith.constant 1.000000e+00 : f32
    %44 = vector.broadcast %cst_11 : f32 to vector<16x256xf32>
    %45 = arith.select %43, %15, %44 : vector<16x256xi1>, vector<16x256xf32>
    %cst_12 = arith.constant 1.000000e+00 : f32
    %46 = vector.broadcast %cst_12 : f32 to vector<16x256xf32>
    %47 = arith.divf %46, %45 : vector<16x256xf32>
    %cst_13 = arith.constant 1.250000e-01 : f32
    %48 = vector.broadcast %cst_13 : f32 to vector<16x256xf32>
    %49 = arith.mulf %47, %48 : vector<16x256xf32>
    %50 = arith.sitofp %26 : vector<16x256xi32> to vector<16x256xf32>
    %cst_14 = arith.constant 1.250000e-01 : f32
    %51 = vector.broadcast %cst_14 : f32 to vector<16x256xf32>
    %52 = arith.mulf %50, %51 : vector<16x256xf32>
    %cst_15 = arith.constant 1.000000e+00 : f32
    %53 = vector.broadcast %cst_15 : f32 to vector<16x256xf32>
    %54 = arith.subf %52, %53 : vector<16x256xf32>
    %55 = arith.mulf %18, %49 : vector<16x256xf32>
    %56 = arith.subf %54, %55 : vector<16x256xf32>
    %57 = arith.sitofp %24 : vector<16x256xi32> to vector<16x256xf32>
    %cst_16 = arith.constant 1.250000e-01 : f32
    %58 = vector.broadcast %cst_16 : f32 to vector<16x256xf32>
    %59 = arith.mulf %57, %58 : vector<16x256xf32>
    %cst_17 = arith.constant 1.000000e+00 : f32
    %60 = vector.broadcast %cst_17 : f32 to vector<16x256xf32>
    %61 = arith.subf %59, %60 : vector<16x256xf32>
    %62 = arith.mulf %21, %49 : vector<16x256xf32>
    %63 = arith.subf %61, %62 : vector<16x256xf32>
    %64 = arith.sitofp %30 : vector<16x256xi32> to vector<16x256xf32>
    %cst_18 = arith.constant 1.250000e-01 : f32
    %65 = vector.broadcast %cst_18 : f32 to vector<16x256xf32>
    %66 = arith.mulf %64, %65 : vector<16x256xf32>
    %cst_19 = arith.constant 1.000000e+00 : f32
    %67 = vector.broadcast %cst_19 : f32 to vector<16x256xf32>
    %68 = arith.subf %66, %67 : vector<16x256xf32>
    %69 = arith.mulf %11, %49 : vector<16x256xf32>
    %70 = arith.subf %68, %69 : vector<16x256xf32>
    %cst_20 = arith.constant 0.000000e+00 : f32
    %71 = vector.broadcast %cst_20 : f32 to vector<16x256xf32>
    %72 = arith.select %41, %56, %71 : vector<16x256xi1>, vector<16x256xf32>
    %c0_21 = arith.constant 0 : index
    %c0_22 = arith.constant 0 : index
    %c0_23 = arith.constant 0 : index
    %73 = vector.load %arg3[%c0_21, %c0_22, %c0_23] : memref<1x16x256xf32, #tpu.memory_space<vmem>>, vector<1x16x256xf32>
    %74 = vector.shape_cast %73 : vector<1x16x256xf32> to vector<16x256xf32>
    %75 = vector.shape_cast %72 : vector<16x256xf32> to vector<1x16x256xf32>
    tpu.vector_store %arg3[%c0_21, %c0_22, %c0_23], %75 {strides = array<i32>} : memref<1x16x256xf32, #tpu.memory_space<vmem>>, vector<1x16x256xf32>,
    %cst_24 = arith.constant 0.000000e+00 : f32
    %76 = vector.broadcast %cst_24 : f32 to vector<16x256xf32>
    %77 = arith.select %41, %63, %76 : vector<16x256xi1>, vector<16x256xf32>
    %c0_25 = arith.constant 0 : index
    %c0_26 = arith.constant 0 : index
    %c0_27 = arith.constant 0 : index
    %78 = vector.load %arg4[%c0_25, %c0_26, %c0_27] : memref<1x16x256xf32, #tpu.memory_space<vmem>>, vector<1x16x256xf32>
    %79 = vector.shape_cast %78 : vector<1x16x256xf32> to vector<16x256xf32>
    %80 = vector.shape_cast %77 : vector<16x256xf32> to vector<1x16x256xf32>
    tpu.vector_store %arg4[%c0_25, %c0_26, %c0_27], %80 {strides = array<i32>} : memref<1x16x256xf32, #tpu.memory_space<vmem>>, vector<1x16x256xf32>,
    %cst_28 = arith.constant 0.000000e+00 : f32
    %81 = vector.broadcast %cst_28 : f32 to vector<16x256xf32>
    %82 = arith.select %41, %70, %81 : vector<16x256xi1>, vector<16x256xf32>
    %c0_29 = arith.constant 0 : index
    %c0_30 = arith.constant 0 : index
    %c0_31 = arith.constant 0 : index
    %83 = vector.load %arg5[%c0_29, %c0_30, %c0_31] : memref<1x16x256xf32, #tpu.memory_space<vmem>>, vector<1x16x256xf32>
    %84 = vector.shape_cast %83 : vector<1x16x256xf32> to vector<16x256xf32>
    %85 = vector.shape_cast %82 : vector<16x256xf32> to vector<1x16x256xf32>
    tpu.vector_store %arg5[%c0_29, %c0_30, %c0_31], %85 {strides = array<i32>} : memref<1x16x256xf32, #tpu.memory_space<vmem>>, vector<1x16x256xf32>,
    return
  }
  func.func @transform_0(%arg0: i32, %arg1: i32) -> (i32, i32, i32) {
    %c0_i32 = arith.constant 0 : i32
    %c0_i32_0 = arith.constant 0 : i32
    return %arg0, %arg1, %c0_i32 : i32, i32, i32
  }
  func.func @transform_1(%arg0: i32, %arg1: i32) -> (i32, i32, i32) {
    %c0_i32 = arith.constant 0 : i32
    %c0_i32_0 = arith.constant 0 : i32
    return %arg0, %arg1, %c0_i32 : i32, i32, i32
  }
  func.func @transform_2(%arg0: i32, %arg1: i32) -> (i32, i32, i32) {
    %c0_i32 = arith.constant 0 : i32
    %c0_i32_0 = arith.constant 0 : i32
    return %arg0, %arg1, %c0_i32 : i32, i32, i32
  }
  func.func @transform_3(%arg0: i32, %arg1: i32) -> (i32, i32, i32) {
    %c0_i32 = arith.constant 0 : i32
    %c0_i32_0 = arith.constant 0 : i32
    return %arg0, %arg1, %c0_i32 : i32, i32, i32
  }
}

</mosaic_0001>

<llo_original>
// kernel: gridding_reverse.1
$region0: #{gridding_reverse.1}
  #allocation0 [shape = 'u32[]', space=smem, size = 0x4, offset = 0x4, fixed_abs, tag = 'smem constant byte address 0x4 - core index']
  #allocation1 [shape = 'u32[144,128]{1,0:T(1,128)}', space=vmem, size = 0x12000, scoped, tag = 'internal scratch']
  %s0 = inlined_call_operand.vmem [shape: f32[2,16,256], index: 0, kind: input, shape index: {}]
  %s1 = inlined_call_operand.vmem [shape: f32[2,16,256], index: 1, kind: output, shape index: {0}]
  %s2 = inlined_call_operand.vmem [shape: f32[2,16,256], index: 2, kind: output, shape index: {1}]
  %s3 = inlined_call_operand.vmem [shape: f32[2,16,256], index: 3, kind: output, shape index: {2}]
  %4 = xla_tuple %s1, %s2, %s3
  %s5 = sld [smem:[#allocation0]]
  $region53: #{gridding_reverse.1} parent=0
    _
  %s7 = ssub.s32 1, %s5
  %s8 = scalar_select 0, %s7, %s5
  loop: start=0, step=1, limit=4
  $region2: #{gridding_reverse.1} parent=0 // loop_pre_header
    _
  $region3: #{gridding_reverse.1} parent=0 // loop_header
    %s10 = sphi 0, %s14
    %p11 = scmp.ge.s32.totalorder %s10, 4
    %s17 = sphi 0, %s29
    %s18 = sphi 0, %s25
    %s19 = sphi 0, %s17
    %s20 = sphi 0, %s18
    %s21 = sphi 0, %s19
    %s22 = sphi 0, %s20
    %s34 = sphi 0, %s36
    %s37 = sphi 0, %s34
    %s38 = sphi 0, %s37
    %s54 = sphi 0, %s38
    %s62 = sphi 0, %s64
    %s65 = sphi 0, %s62
    %s66 = sphi 0, %s65
    %s82 = sphi 0, %s66
    %s90 = sphi 0, %s92
    %s93 = sphi 0, %s90
    %s94 = sphi 0, %s93
    %s110 = sphi 0, %s94
    %s118 = sphi 0, %s120
    %s121 = sphi 0, %s118
    %s122 = sphi 0, %s121
    %s138 = sphi 0, %s122
  $region4: #{gridding_reverse.1} parent=0 // loop_header_branch
    %13 = sbr.rel (%p11) target = $region8
  $region5: #{gridding_reverse.1} parent=0 // loop_body
    %s15 = ssub.s32 %s10, 1
    %s16 = ssub.s32 %s10, 2
    %s23 = sadd.s32 1, %s18
    %p24 = scmp.ge.s32.totalorder %s23, 1
    %s25 = scalar_select %p24, 0, %s23
    %s26 = sadd.s32 1, %s17
    %s27 = scalar_select %p24, %s26, %s17
    %p28 = scmp.ge.s32.totalorder %s27, 2
    %s29 = scalar_select %p28, 0, %s27
    %s30 = ssub.s32 %s17, %s29
    %s31 = ssub.s32 %s18, %s25
    %s32 = sor.u32 %s30, %s31
    %p33 = scmp.eq.s32.totalorder %s32, 0
    %s35 = sadd.s32 %s34, 1
    %s36 = scalar_select %p33, %s34, %s35
    %p39 = pneg %p33
    %p40 = scmp.eq.s32.totalorder %s10, 1
    %p41 = por %p39, %p40
    %p42 = scmp.ne.s32.totalorder %s34, %s37
    %p43 = scmp.eq.s32.totalorder %s10, 0
    %p44 = por %p42, %p43
    %p45 = scmp.ne.s32.totalorder %s34, %s37
    %p46 = scmp.eq.s32.totalorder %s15, 1
    %p47 = por %p45, %p46
    %p48 = scmp.ne.s32.totalorder %s37, %s38
    %p49 = scmp.eq.s32.totalorder %s15, 0
    %p50 = por %p48, %p49
    %p51 = scmp.ne.s32.totalorder %s37, %s38
    %p52 = scmp.eq.s32.totalorder %s16, 1
    %p53 = por %p51, %p52
    %p55 = scmp.ne.s32.totalorder %s38, %s54
    %p56 = scmp.eq.s32.totalorder %s16, 0
    %p57 = por %p55, %p56
    %s58 = ssub.s32 %s17, %s29
    %s59 = ssub.s32 %s18, %s25
    %s60 = sor.u32 %s58, %s59
    %p61 = scmp.eq.s32.totalorder %s60, 0
    %s63 = sadd.s32 %s62, 1
    %s64 = scalar_select %p61, %s62, %s63
    %p67 = pneg %p61
    %p68 = scmp.eq.s32.totalorder %s10, 1
    %p69 = por %p67, %p68
    %p70 = scmp.ne.s32.totalorder %s62, %s65
    %p71 = scmp.eq.s32.totalorder %s10, 0
    %p72 = por %p70, %p71
    %p73 = scmp.ne.s32.totalorder %s62, %s65
    %p74 = scmp.eq.s32.totalorder %s15, 1
    %p75 = por %p73, %p74
    %p76 = scmp.ne.s32.totalorder %s65, %s66
    %p77 = scmp.eq.s32.totalorder %s15, 0
    %p78 = por %p76, %p77
    %p79 = scmp.ne.s32.totalorder %s65, %s66
    %p80 = scmp.eq.s32.totalorder %s16, 1
    %p81 = por %p79, %p80
    %p83 = scmp.ne.s32.totalorder %s66, %s82
    %p84 = scmp.eq.s32.totalorder %s16, 0
    %p85 = por %p83, %p84
    %s86 = ssub.s32 %s17, %s29
    %s87 = ssub.s32 %s18, %s25
    %s88 = sor.u32 %s86, %s87
    %p89 = scmp.eq.s32.totalorder %s88, 0
    %s91 = sadd.s32 %s90, 1
    %s92 = scalar_select %p89, %s90, %s91
    %p95 = pneg %p89
    %p96 = scmp.eq.s32.totalorder %s10, 1
    %p97 = por %p95, %p96
    %p98 = scmp.ne.s32.totalorder %s90, %s93
    %p99 = scmp.eq.s32.totalorder %s10, 0
    %p100 = por %p98, %p99
    %p101 = scmp.ne.s32.totalorder %s90, %s93
    %p102 = scmp.eq.s32.totalorder %s15, 1
    %p103 = por %p101, %p102
    %p104 = scmp.ne.s32.totalorder %s93, %s94
    %p105 = scmp.eq.s32.totalorder %s15, 0
    %p106 = por %p104, %p105
    %p107 = scmp.ne.s32.totalorder %s93, %s94
    %p108 = scmp.eq.s32.totalorder %s16, 1
    %p109 = por %p107, %p108
    %p111 = scmp.ne.s32.totalorder %s94, %s110
    %p112 = scmp.eq.s32.totalorder %s16, 0
    %p113 = por %p111, %p112
    %s114 = ssub.s32 %s17, %s29
    %s115 = ssub.s32 %s18, %s25
    %s116 = sor.u32 %s114, %s115
    %p117 = scmp.eq.s32.totalorder %s116, 0
    %s119 = sadd.s32 %s118, 1
    %s120 = scalar_select %p117, %s118, %s119
    %p123 = pneg %p117
    %p124 = scmp.eq.s32.totalorder %s10, 1
    %p125 = por %p123, %p124
    %p126 = scmp.ne.s32.totalorder %s118, %s121
    %p127 = scmp.eq.s32.totalorder %s10, 0
    %p128 = por %p126, %p127
    %p129 = scmp.ne.s32.totalorder %s118, %s121
    %p130 = scmp.eq.s32.totalorder %s15, 1
    %p131 = por %p129, %p130
    %p132 = scmp.ne.s32.totalorder %s121, %s122
    %p133 = scmp.eq.s32.totalorder %s15, 0
    %p134 = por %p132, %p133
    %p135 = scmp.ne.s32.totalorder %s121, %s122
    %p136 = scmp.eq.s32.totalorder %s16, 1
    %p137 = por %p135, %p136
    %p139 = scmp.ne.s32.totalorder %s122, %s138
    %p140 = scmp.eq.s32.totalorder %s16, 0
    %p141 = por %p139, %p140
    %p142 = scmp.le.s32.totalorder 1, %s10
    %p143 = scmp.lt.s32.totalorder %s10, 3
    %p144 = pnand %p142, %p143
    %p145 = pneg %p144
    // Predicated region
    $region9: #{gridding_reverse.1} parent=5 // pred_check
      _
    $region10: #{gridding_reverse.1} parent=5 // pred_check_branch
      %147 = sbr.rel (%p144) target = $region12
    $region11: #{gridding_reverse.1} parent=5 // pred_region
      %s148 = ssub.s32 %s10, 1
    $region12: #{gridding_reverse.1} parent=5 // pred_fallthru
      _
    %p149 = scmp.lt.s32.totalorder %s10, 2
    // Predicated region
    $region13: #{gridding_reverse.1} parent=5 // pred_check
      %p150 = pneg %p149
    $region14: #{gridding_reverse.1} parent=5 // pred_check_branch
      %152 = sbr.rel (%p150) target = $region16
    $region15: #{gridding_reverse.1} parent=5 // pred_region
      // Predicated region
      $region17: #{gridding_reverse.1} parent=15 // pred_check
        %p153 = pneg %p44
      $region18: #{gridding_reverse.1} parent=15 // pred_check_branch
        %155 = sbr.rel (%p153) target = $region20
      $region19: #{gridding_reverse.1} parent=15 // pred_region
        %s156 = smul.u32 2, %s18
        %p157 = scmp.lt.s32.totalorder %s17, 1
        %s158 = scalar_select %p157, %s17, 1
        %p159 = scmp.lt.s32.totalorder %s156, 1
        %s160 = scalar_select %p159, %s156, 1
        %s161 = smul.addr %s160, 2
        %s162 = smul.addr %s158, 4
        %s163 = sadd.s32 %s161, %s162
        %s164 = smul.addr %s163, 8
        %s165 = scalar_lea.vmem %s0, %s164
        %s166 = smul.u32 2, %s18
      $region20: #{gridding_reverse.1} parent=15 // pred_fallthru
        _
    $region16: #{gridding_reverse.1} parent=5 // pred_fallthru
      _
    %p167 = scmp.le.s32.totalorder 1, %s10
    %p168 = scmp.lt.s32.totalorder %s10, 3
    %p169 = pnand %p167, %p168
    %p170 = pneg %p169
    // Predicated region
    $region21: #{gridding_reverse.1} parent=5 // pred_check
      _
    $region22: #{gridding_reverse.1} parent=5 // pred_check_branch
      %172 = sbr.rel (%p169) target = $region24
    $region23: #{gridding_reverse.1} parent=5 // pred_region
      %s173 = ssub.s32 %s10, 1
      %s174 = smul.u32 2, %s20
      %p175 = scmp.lt.s32.totalorder %s19, 1
      %s176 = scalar_select %p175, %s19, 1
      %p177 = scmp.lt.s32.totalorder %s174, 1
      %s178 = scalar_select %p177, %s174, 1
      %s179 = smul.addr %s178, 2
      %s180 = smul.addr %s176, 4
      %s181 = sadd.s32 %s179, %s180
      %s182 = smul.addr %s181, 8
      %s183 = scalar_lea.vmem %s0, %s182
      %p184 = pneg %p50
      %p185 = pneg %p47
      %p186 = pneg %p78
      %p187 = pneg %p75
      %s188 = smul.u32 2, %s20
      %p189 = scmp.lt.s32.totalorder %s19, 1
      %s190 = scalar_select %p189, %s19, 1
      %p191 = scmp.lt.s32.totalorder %s188, 1
      %s192 = scalar_select %p191, %s188, 1
      %s193 = smul.addr %s192, 2
      %s194 = smul.addr %s190, 4
      %s195 = sadd.s32 %s193, %s194
      %s196 = smul.addr %s195, 8
      %s197 = scalar_lea.vmem %s1, %s196
      %p198 = pneg %p106
      %p199 = pneg %p103
      %s200 = smul.u32 2, %s20
      %p201 = scmp.lt.s32.totalorder %s19, 1
      %s202 = scalar_select %p201, %s19, 1
      %p203 = scmp.lt.s32.totalorder %s200, 1
      %s204 = scalar_select %p203, %s200, 1
      %s205 = smul.addr %s204, 2
      %s206 = smul.addr %s202, 4
      %s207 = sadd.s32 %s205, %s206
      %s208 = smul.addr %s207, 8
      %s209 = scalar_lea.vmem %s2, %s208
      %p210 = pneg %p134
      %p211 = pneg %p131
      %s212 = smul.u32 2, %s20
      %p213 = scmp.lt.s32.totalorder %s19, 1
      %s214 = scalar_select %p213, %s19, 1
      %p215 = scmp.lt.s32.totalorder %s212, 1
      %s216 = scalar_select %p215, %s212, 1
      %s217 = smul.addr %s216, 2
      %s218 = smul.addr %s214, 4
      %s219 = sadd.s32 %s217, %s218
      %s220 = smul.addr %s219, 8
      %s221 = scalar_lea.vmem %s3, %s220
      %s222 = smul.u32 2, %s20
      %p223 = scmp.lt.s32.totalorder %s19, 1
      %s224 = scalar_select %p223, %s19, 1
      %p225 = scmp.lt.s32.totalorder %s222, 1
      %s226 = scalar_select %p225, %s222, 1
      %s227 = smul.addr %s226, 2
      %s228 = smul.addr %s224, 4
      %s229 = sadd.s32 %s227, %s228
      %s230 = smul.addr %s229, 8
      %s231 = scalar_lea.vmem %s0, %s230
      %s232 = smul.u32 2, %s20
      %s233 = smul.u32 2, %s20
      %p234 = scmp.lt.s32.totalorder %s19, 1
      %s235 = scalar_select %p234, %s19, 1
      %p236 = scmp.lt.s32.totalorder %s233, 1
      %s237 = scalar_select %p236, %s233, 1
      %s238 = smul.addr %s237, 2
      %s239 = smul.addr %s235, 4
      %s240 = sadd.s32 %s238, %s239
      %s241 = smul.addr %s240, 8
      %s242 = scalar_lea.vmem %s1, %s241
      %s243 = smul.u32 2, %s20
      %s244 = smul.u32 2, %s20
      %p245 = scmp.lt.s32.totalorder %s19, 1
      %s246 = scalar_select %p245, %s19, 1
      %p247 = scmp.lt.s32.totalorder %s244, 1
      %s248 = scalar_select %p247, %s244, 1
      %s249 = smul.addr %s248, 2
      %s250 = smul.addr %s246, 4
      %s251 = sadd.s32 %s249, %s250
      %s252 = smul.addr %s251, 8
      %s253 = scalar_lea.vmem %s2, %s252
      %s254 = smul.u32 2, %s20
      %s255 = smul.u32 2, %s20
      %p256 = scmp.lt.s32.totalorder %s19, 1
      %s257 = scalar_select %p256, %s19, 1
      %p258 = scmp.lt.s32.totalorder %s255, 1
      %s259 = scalar_select %p258, %s255, 1
      %s260 = smul.addr %s259, 2
      %s261 = smul.addr %s257, 4
      %s262 = sadd.s32 %s260, %s261
      %s263 = smul.addr %s262, 8
      %s264 = scalar_lea.vmem %s3, %s263
      %s265 = smul.u32 2, %s20
      %v266 = vld [vmem:[%s231] sm:$0xff]
      %v267 = vld [vmem:[%s231 + $0x8] sm:$0xff]
      %v268 = vld [vmem:[%s231 + $0x10] sm:$0xff]
      %v269 = vld [vmem:[%s231 + $0x18] sm:$0xff]
      %270 = vrot.lane.b32.xlu0 %v266, 1
      %v271 = vpop.permute.xlu0 %270
      %272 = vrot.lane.b32.xlu0 %v268, 1
      %v273 = vpop.permute.xlu0 %272
      %274 = vrot.lane.b32.xlu0 %v267, 1
      %v275 = vpop.permute.xlu0 %274
      %276 = vrot.lane.b32.xlu0 %v269, 1
      %v277 = vpop.permute.xlu0 %276
      %v278 = vlaneseq
      %v279 = vand.u32 %v278, 127
      %vm280 = vcmp.lt.s32.totalorder %v279, 1
      %v281 = vsel %vm280, %v271, %v275
      %v282 = vsel %vm280, %v273, %v277
      %v283 = vsel %vm280, %v275, %v271
      %v284 = vsel %vm280, %v277, %v273
      %285 = vrot.lane.b32.xlu0 %v266, 16
      %v286 = vpop.permute.xlu0 %285
      %287 = vrot.lane.b32.xlu0 %v268, 16
      %v288 = vpop.permute.xlu0 %287
      %289 = vrot.lane.b32.xlu0 %v267, 16
      %v290 = vpop.permute.xlu0 %289
      %291 = vrot.lane.b32.xlu0 %v269, 16
      %v292 = vpop.permute.xlu0 %291
      %vm293 = vcmp.lt.s32.totalorder %v279, 16
      %v294 = vsel %vm293, %v286, %v290
      %v295 = vsel %vm293, %v288, %v292
      %v296 = vsel %vm293, %v290, %v286
      %v297 = vsel %vm293, %v292, %v288
      %298 = vrot.lane.b32.xlu0 %v266, 17
      %v299 = vpop.permute.xlu0 %298
      %300 = vrot.lane.b32.xlu0 %v268, 17
      %v301 = vpop.permute.xlu0 %300
      %302 = vrot.lane.b32.xlu0 %v267, 17
      %v303 = vpop.permute.xlu0 %302
      %304 = vrot.lane.b32.xlu0 %v269, 17
      %v305 = vpop.permute.xlu0 %304
      %vm306 = vcmp.lt.s32.totalorder %v279, 17
      %v307 = vsel %vm306, %v299, %v303
      %v308 = vsel %vm306, %v301, %v305
      %v309 = vsel %vm306, %v303, %v299
      %v310 = vsel %vm306, %v305, %v301
      %v311 = vrot.slane %v266, 7
      %v312 = vrot.slane %v267, 7
      %v313 = vrot.slane %v268, 7
      %v314 = vrot.slane %v269, 7
      %v315 = vlaneseq
      %v316 = vshrl.u32 %v315, 7
      %vm317 = vcmp.lt.s32.totalorder %v316, 1
      %v318 = vsel %vm317, %v311, %v313
      %v319 = vsel %vm317, %v312, %v314
      %v320 = vsel %vm317, %v313, %v311
      %v321 = vsel %vm317, %v314, %v312
      %322 = vrot.lane.b32.xlu0 %v320, 1
      %v323 = vpop.permute.xlu0 %322
      %324 = vrot.lane.b32.xlu0 %v318, 1
      %v325 = vpop.permute.xlu0 %324
      %326 = vrot.lane.b32.xlu0 %v321, 1
      %v327 = vpop.permute.xlu0 %326
      %328 = vrot.lane.b32.xlu0 %v319, 1
      %v329 = vpop.permute.xlu0 %328
      %v330 = vsel %vm280, %v323, %v327
      %v331 = vsel %vm280, %v325, %v329
      %v332 = vsel %vm280, %v327, %v323
      %v333 = vsel %vm280, %v329, %v325
      %334 = vrot.lane.b32.xlu0 %v320, 16
      %v335 = vpop.permute.xlu0 %334
      %336 = vrot.lane.b32.xlu0 %v318, 16
      %v337 = vpop.permute.xlu0 %336
      %338 = vrot.lane.b32.xlu0 %v321, 16
      %v339 = vpop.permute.xlu0 %338
      %340 = vrot.lane.b32.xlu0 %v319, 16
      %v341 = vpop.permute.xlu0 %340
      %v342 = vsel %vm293, %v335, %v339
      %v343 = vsel %vm293, %v337, %v341
      %v344 = vsel %vm293, %v339, %v335
      %v345 = vsel %vm293, %v341, %v337
      %346 = vrot.lane.b32.xlu0 %v320, 17
      %v347 = vpop.permute.xlu0 %346
      %348 = vrot.lane.b32.xlu0 %v318, 17
      %v349 = vpop.permute.xlu0 %348
      %350 = vrot.lane.b32.xlu0 %v321, 17
      %v351 = vpop.permute.xlu0 %350
      %352 = vrot.lane.b32.xlu0 %v319, 17
      %v353 = vpop.permute.xlu0 %352
      %v354 = vsel %vm306, %v347, %v351
      %v355 = vsel %vm306, %v349, %v353
      %v356 = vsel %vm306, %v351, %v347
      %v357 = vsel %vm306, %v353, %v349
      %v358 = vadd.f32 %v320, %v332
      %v359 = vadd.f32 %v321, %v330
      %v360 = vadd.f32 %v318, %v333
      %v361 = vadd.f32 %v319, %v331
      %v362 = vadd.f32 %v344, %v356
      %v363 = vadd.f32 %v342, %v354
      %v364 = vadd.f32 %v345, %v357
      %v365 = vadd.f32 %v343, %v355
      %v366 = vadd.f32 %v358, %v362
      %v367 = vadd.f32 %v359, %v363
      %v368 = vadd.f32 %v360, %v364
      %v369 = vadd.f32 %v361, %v365
      %v370 = vadd.f32 %v266, %v283
      %v371 = vadd.f32 %v267, %v281
      %v372 = vadd.f32 %v268, %v284
      %v373 = vadd.f32 %v269, %v282
      %v374 = vadd.f32 %v296, %v309
      %v375 = vadd.f32 %v294, %v307
      %v376 = vadd.f32 %v297, %v310
      %v377 = vadd.f32 %v295, %v308
      %v378 = vadd.f32 %v370, %v374
      %v379 = vadd.f32 %v371, %v375
      %v380 = vadd.f32 %v372, %v376
      %v381 = vadd.f32 %v373, %v377
      %v382 = vadd.f32 %v378, %v366
      %v383 = vadd.f32 %v379, %v367
      %v384 = vadd.f32 %v380, %v368
      %v385 = vadd.f32 %v381, %v369
      %v386 = vadd.f32 %v283, %v309
      %v387 = vadd.f32 %v281, %v307
      %v388 = vadd.f32 %v284, %v310
      %v389 = vadd.f32 %v282, %v308
      %v390 = vadd.f32 %v332, %v356
      %v391 = vadd.f32 %v330, %v354
      %v392 = vadd.f32 %v333, %v357
      %v393 = vadd.f32 %v331, %v355
      %v394 = vadd.f32 %v386, %v390
      %v395 = vadd.f32 %v387, %v391
      %v396 = vadd.f32 %v388, %v392
      %v397 = vadd.f32 %v389, %v393
      %v398 = vadd.f32 %v374, %v362
      %v399 = vadd.f32 %v375, %v363
      %v400 = vadd.f32 %v376, %v364
      %v401 = vadd.f32 %v377, %v365
      %v402 = vadd.s32 %v279, 128
      %v403 = vshra.s32 %v279, 4
      %v404 = vshra.s32 %v402, 4
      %v405 = vand.u32 %v279, 15
      %v406 = vand.u32 %v402, 15
      %s407 = smul.u32 %s20, 16
      %v408 = vadd.s32 %v316, 8
      %v409 = vstv %s407
      %v410 = vadd.s32 %v409, %v316
      %v411 = vadd.s32 %v409, %v408
      %vm412 = vcmp.ge.s32.totalorder %v405, 1
      %vm413 = vcmp.ge.s32.totalorder %v406, 1
      %vm414 = vcmp.ge.s32.totalorder %v403, 1
      %vm415 = vcmp.ge.s32.totalorder %v404, 1
      %vm416 = vmand %vm412, %vm414
      %vm417 = vmand %vm413, %vm415
      %vm418 = vcmp.ge.s32.totalorder %v410, 1
      %vm419 = vcmp.ge.s32.totalorder %v411, 1
      %vm420 = vmand %vm416, %vm418
      %vm421 = vmand %vm417, %vm418
      %vm422 = vmand %vm416, %vm419
      %vm423 = vmand %vm417, %vm419
      %vm424 = vcmp.ne.f32.partialorder %v382, 0.0
      %vm425 = vcmp.ne.f32.partialorder %v383, 0.0
      %vm426 = vcmp.ne.f32.partialorder %v384, 0.0
      %vm427 = vcmp.ne.f32.partialorder %v385, 0.0
      %vm428 = vmand %vm420, %vm424
      %vm429 = vmand %vm421, %vm425
      %vm430 = vmand %vm422, %vm426
      %vm431 = vmand %vm423, %vm427
      %v432 = vsel %vm424, %v382, 1.0
      %v433 = vsel %vm425, %v383, 1.0
      %v434 = vsel %vm426, %v384, 1.0
      %v435 = vsel %vm427, %v385, 1.0
      %v436 = vrcp.pop %v432
      %v437 = vmul.f32 1.0, %v436
      %v438 = vrcp.pop %v433
      %v439 = vmul.f32 1.0, %v438
      %v440 = vrcp.pop %v434
      %v441 = vmul.f32 1.0, %v440
      %v442 = vrcp.pop %v435
      %v443 = vmul.f32 1.0, %v442
      %v444 = vmul.f32 %v437, 0.125
      %v445 = vmul.f32 %v439, 0.125
      %v446 = vmul.f32 %v441, 0.125
      %v447 = vmul.f32 %v443, 0.125
      %v448 = vcvt.s32.f32 %v405
      %v449 = vcvt.s32.f32 %v406
      %v450 = vmul.f32 %v448, 0.125
      %v451 = vmul.f32 %v449, 0.125
      %v452 = vsub.f32 %v450, 1.0
      %v453 = vsub.f32 %v451, 1.0
      %v454 = vmul.f32 %v394, %v444
      %v455 = vmul.f32 %v395, %v445
      %v456 = vmul.f32 %v396, %v446
      %v457 = vmul.f32 %v397, %v447
      %v458 = vsub.f32 %v452, %v454
      %v459 = vsub.f32 %v453, %v455
      %v460 = vsub.f32 %v452, %v456
      %v461 = vsub.f32 %v453, %v457
      %v462 = vcvt.s32.f32 %v403
      %v463 = vcvt.s32.f32 %v404
      %v464 = vmul.f32 %v462, 0.125
      %v465 = vmul.f32 %v463, 0.125
      %v466 = vsub.f32 %v464, 1.0
      %v467 = vsub.f32 %v465, 1.0
      %v468 = vmul.f32 %v398, %v444
      %v469 = vmul.f32 %v399, %v445
      %v470 = vmul.f32 %v400, %v446
      %v471 = vmul.f32 %v401, %v447
      %v472 = vsub.f32 %v466, %v468
      %v473 = vsub.f32 %v467, %v469
      %v474 = vsub.f32 %v466, %v470
      %v475 = vsub.f32 %v467, %v471
      %v476 = vcvt.s32.f32 %v410
      %v477 = vcvt.s32.f32 %v411
      %v478 = vmul.f32 %v476, 0.125
      %v479 = vmul.f32 %v477, 0.125
      %v480 = vsub.f32 %v478, 1.0
      %v481 = vsub.f32 %v479, 1.0
      %v482 = vmul.f32 %v366, %v444
      %v483 = vmul.f32 %v367, %v445
      %v484 = vmul.f32 %v368, %v446
      %v485 = vmul.f32 %v369, %v447
      %v486 = vsub.f32 %v480, %v482
      %v487 = vsub.f32 %v480, %v483
      %v488 = vsub.f32 %v481, %v484
      %v489 = vsub.f32 %v481, %v485
      %v490 = vsel %vm428, %v458, 0.0
      %v491 = vsel %vm429, %v459, 0.0
      %v492 = vsel %vm430, %v460, 0.0
      %v493 = vsel %vm431, %v461, 0.0
      %494 = vst [vmem:[%s242] sm:$0xff] %v490
      %495 = vst [vmem:[%s242 + $0x8] sm:$0xff] %v491
      %496 = vst [vmem:[%s242 + $0x10] sm:$0xff] %v492
      %497 = vst [vmem:[%s242 + $0x18] sm:$0xff] %v493
      %v498 = vsel %vm428, %v472, 0.0
      %v499 = vsel %vm429, %v473, 0.0
      %v500 = vsel %vm430, %v474, 0.0
      %v501 = vsel %vm431, %v475, 0.0
      %502 = vst [vmem:[%s253] sm:$0xff] %v498
      %503 = vst [vmem:[%s253 + $0x8] sm:$0xff] %v499
      %504 = vst [vmem:[%s253 + $0x10] sm:$0xff] %v500
      %505 = vst [vmem:[%s253 + $0x18] sm:$0xff] %v501
      %v506 = vsel %vm428, %v486, 0.0
      %v507 = vsel %vm429, %v487, 0.0
      %v508 = vsel %vm430, %v488, 0.0
      %v509 = vsel %vm431, %v489, 0.0
      %510 = vst [vmem:[%s264] sm:$0xff] %v506
      %511 = vst [vmem:[%s264 + $0x8] sm:$0xff] %v507
      %512 = vst [vmem:[%s264 + $0x10] sm:$0xff] %v508
      %513 = vst [vmem:[%s264 + $0x18] sm:$0xff] %v509
      %s514 = smul.u32 2, %s20
      %p515 = scmp.lt.s32.totalorder %s19, 1
      %s516 = scalar_select %p515, %s19, 1
      %p517 = scmp.lt.s32.totalorder %s514, 1
      %s518 = scalar_select %p517, %s514, 1
      %s519 = smul.addr %s518, 2
      %s520 = smul.addr %s516, 4
      %s521 = sadd.s32 %s519, %s520
      %s522 = smul.addr %s521, 8
      %s523 = scalar_lea.vmem %s1, %s522
      %s524 = smul.u32 2, %s20
      %p525 = scmp.lt.s32.totalorder %s19, 1
      %s526 = scalar_select %p525, %s19, 1
      %p527 = scmp.lt.s32.totalorder %s524, 1
      %s528 = scalar_select %p527, %s524, 1
      %s529 = smul.addr %s528, 2
      %s530 = smul.addr %s526, 4
      %s531 = sadd.s32 %s529, %s530
      %s532 = smul.addr %s531, 8
      %s533 = scalar_lea.vmem %s2, %s532
      %s534 = smul.u32 2, %s20
      %p535 = scmp.lt.s32.totalorder %s19, 1
      %s536 = scalar_select %p535, %s19, 1
      %p537 = scmp.lt.s32.totalorder %s534, 1
      %s538 = scalar_select %p537, %s534, 1
      %s539 = smul.addr %s538, 2
      %s540 = smul.addr %s536, 4
      %s541 = sadd.s32 %s539, %s540
      %s542 = smul.addr %s541, 8
      %s543 = scalar_lea.vmem %s3, %s542
      // Predicated region
      $region25: #{gridding_reverse.1} parent=23 // pred_check
        %p544 = pneg %p75
      $region26: #{gridding_reverse.1} parent=23 // pred_check_branch
        %546 = sbr.rel (%p544) target = $region28
      $region27: #{gridding_reverse.1} parent=23 // pred_region
        %s547 = smul.u32 2, %s20
      $region28: #{gridding_reverse.1} parent=23 // pred_fallthru
        _
      // Predicated region
      $region29: #{gridding_reverse.1} parent=23 // pred_check
        %p548 = pneg %p103
      $region30: #{gridding_reverse.1} parent=23 // pred_check_branch
        %550 = sbr.rel (%p548) target = $region32
      $region31: #{gridding_reverse.1} parent=23 // pred_region
        %s551 = smul.u32 2, %s20
      $region32: #{gridding_reverse.1} parent=23 // pred_fallthru
        _
      // Predicated region
      $region33: #{gridding_reverse.1} parent=23 // pred_check
        %p552 = pneg %p131
      $region34: #{gridding_reverse.1} parent=23 // pred_check_branch
        %554 = sbr.rel (%p552) target = $region36
      $region35: #{gridding_reverse.1} parent=23 // pred_region
        %s555 = smul.u32 2, %s20
      $region36: #{gridding_reverse.1} parent=23 // pred_fallthru
        _
    $region24: #{gridding_reverse.1} parent=5 // pred_fallthru
      _
    %p556 = scmp.le.s32.totalorder 2, %s10
    // Predicated region
    $region37: #{gridding_reverse.1} parent=5 // pred_check
      %p557 = pneg %p556
    $region38: #{gridding_reverse.1} parent=5 // pred_check_branch
      %559 = sbr.rel (%p557) target = $region40
    $region39: #{gridding_reverse.1} parent=5 // pred_region
      %s560 = ssub.s32 %s10, 2
      // Predicated region
      $region41: #{gridding_reverse.1} parent=39 // pred_check
        %p561 = pneg %p81
      $region42: #{gridding_reverse.1} parent=39 // pred_check_branch
        %563 = sbr.rel (%p561) target = $region44
      $region43: #{gridding_reverse.1} parent=39 // pred_region
        %s564 = smul.u32 2, %s22
        %p565 = scmp.lt.s32.totalorder %s21, 1
        %s566 = scalar_select %p565, %s21, 1
        %p567 = scmp.lt.s32.totalorder %s564, 1
        %s568 = scalar_select %p567, %s564, 1
        %s569 = smul.addr %s568, 2
        %s570 = smul.addr %s566, 4
        %s571 = sadd.s32 %s569, %s570
        %s572 = smul.addr %s571, 8
        %s573 = scalar_lea.vmem %s1, %s572
      $region44: #{gridding_reverse.1} parent=39 // pred_fallthru
        _
      // Predicated region
      $region45: #{gridding_reverse.1} parent=39 // pred_check
        %p574 = pneg %p109
      $region46: #{gridding_reverse.1} parent=39 // pred_check_branch
        %576 = sbr.rel (%p574) target = $region48
      $region47: #{gridding_reverse.1} parent=39 // pred_region
        %s577 = smul.u32 2, %s22
        %p578 = scmp.lt.s32.totalorder %s21, 1
        %s579 = scalar_select %p578, %s21, 1
        %p580 = scmp.lt.s32.totalorder %s577, 1
        %s581 = scalar_select %p580, %s577, 1
        %s582 = smul.addr %s581, 2
        %s583 = smul.addr %s579, 4
        %s584 = sadd.s32 %s582, %s583
        %s585 = smul.addr %s584, 8
        %s586 = scalar_lea.vmem %s2, %s585
      $region48: #{gridding_reverse.1} parent=39 // pred_fallthru
        _
      // Predicated region
      $region49: #{gridding_reverse.1} parent=39 // pred_check
        %p587 = pneg %p137
      $region50: #{gridding_reverse.1} parent=39 // pred_check_branch
        %589 = sbr.rel (%p587) target = $region52
      $region51: #{gridding_reverse.1} parent=39 // pred_region
        %s590 = smul.u32 2, %s22
        %p591 = scmp.lt.s32.totalorder %s21, 1
        %s592 = scalar_select %p591, %s21, 1
        %p593 = scmp.lt.s32.totalorder %s590, 1
        %s594 = scalar_select %p593, %s590, 1
        %s595 = smul.addr %s594, 2
        %s596 = smul.addr %s592, 4
        %s597 = sadd.s32 %s595, %s596
        %s598 = smul.addr %s597, 8
        %s599 = scalar_lea.vmem %s3, %s598
      $region52: #{gridding_reverse.1} parent=39 // pred_fallthru
        _
    $region40: #{gridding_reverse.1} parent=5 // pred_fallthru
      _
  $region6: #{gridding_reverse.1} parent=0 // loop_footer
    %s14 = sadd.s32 1, %s10
  $region7: #{gridding_reverse.1} parent=0 // loop_footer_branch
    %9 = sbr.rel target = $region3
  $region8: #{gridding_reverse.1} parent=0 // loop_exit
    _

</llo_original>
